<compile_context>
chip_gen: v7x
topology: tpu7x:2x2x1
jax: 0.10.0
libtpu: 0.0.40
codegen_flags: <defaults>
</compile_context>

<pallas_src>
import functools

import jax
import jax.numpy as jnp
from jax import lax
from jax.experimental import pallas as pl
from jax.experimental.pallas import tpu as pltpu


def _round_up(x, m):
    return ((x + m - 1) // m) * m


def _vmem_limit_bytes():
    """Generation-aware scoped-VMEM budget (~3/4 of physical, capped)."""
    default_cap = 64 * 1024 * 1024
    try:
        info = pltpu.get_tpu_info()
        cap = int(getattr(info, "vmem_capacity_bytes", default_cap))
    except Exception:  # pragma: no cover - conservative fallback
        cap = default_cap
    return max(32 * 1024 * 1024, min(cap * 3 // 4, 100 * 1024 * 1024))


# ---------------------------------------------------------------------------
# Kernel 1: row-wise L2 normalization (+ cast to the MXU compute dtype).
# Runs once over the (C, E) class weights so the main kernel's inner loop is
# pure matmul + online softmax.
# ---------------------------------------------------------------------------
def _l2norm_kernel(x_ref, o_ref):
    x = x_ref[...].astype(jnp.float32)
    norm = jnp.sqrt(jnp.sum(x * x, axis=1, keepdims=True))
    # Clamp the norm (not the sum of squares) to match F.l2_normalize.
    o_ref[...] = (x / jnp.maximum(norm, 1e-12)).astype(o_ref.dtype)


def _l2_normalize_rows(x, *, tile_rows, out_dtype, vmem_limit):
    rows, e = x.shape
    assert rows % tile_rows == 0
    return pl.pallas_call(
        _l2norm_kernel,
        out_shape=jax.ShapeDtypeStruct((rows, e), out_dtype),
        grid_spec=pltpu.PrefetchScalarGridSpec(
            num_scalar_prefetch=0,
            grid=(rows // tile_rows,),
            in_specs=[pl.BlockSpec((tile_rows, e), lambda i: (i, 0))],
            out_specs=pl.BlockSpec((tile_rows, e), lambda i: (i, 0)),
        ),
        compiler_params=pltpu.CompilerParams(
            dimension_semantics=("parallel",),
            vmem_limit_bytes=vmem_limit),
    )(x)


# ---------------------------------------------------------------------------
# Kernel 2: AM-Softmax logits + online-softmax cross entropy.
# Grid = (N_tiles, C_tiles); C is the reduction ("arbitrary") axis.
# ---------------------------------------------------------------------------
def _amsoftmax_kernel(emb_ref, w_ref, labels_ref, logits_ref, loss_ref,
                      emb_nrm, m_acc, l_acc, t_acc,
                      *, s, margin, num_classes, tile_c, has_class_pad,
                      weight_resident):
    j = pl.program_id(1)

    # First C-tile for this N-tile: normalize the embedding rows once, cache
    # in the compute dtype, and reset the online-softmax accumulators.
    @pl.when(j == 0)
    def _init():
        e = emb_ref[...].astype(jnp.float32)
        norm = jnp.sqrt(jnp.sum(e * e, axis=1, keepdims=True))
        emb_nrm[...] = (e / jnp.maximum(norm, 1e-12)).astype(emb_nrm.dtype)
        m_acc[...] = jnp.full_like(m_acc, -1e30)
        l_acc[...] = jnp.zeros_like(l_acc)
        t_acc[...] = jnp.zeros_like(t_acc)

    if weight_resident:
        # Whole normalized weight matrix is resident in VMEM (loaded once by
        # the constant-index-map BlockSpec); slice the current C tile.
        start = pl.multiple_of(j * tile_c, 128)
        w_tile = w_ref[pl.ds(start, tile_c), :]          # (tile_c, E)
    else:
        w_tile = w_ref[...]                              # streamed (tile_c, E)

    # Cosine logits on the MXU: contract dim 1 of both operands so the
    # (tile_c, E) weight tile is consumed untransposed.
    cos = lax.dot_general(
        emb_nrm[...], w_tile,
        dimension_numbers=(((1,), (1,)), ((), ())),
        preferred_element_type=jnp.float32)              # (tile_n, tile_c)
    logits_ref[...] = cos.astype(logits_ref.dtype)

    tn, tc = cos.shape
    labels = labels_ref[...]                             # (tile_n, 1) int32
    class_ids = j * tile_c + lax.broadcasted_iota(jnp.int32, (1, tc), 1)
    is_target = class_ids == labels                      # (tile_n, tile_c) bool

    m_log = jnp.float32(s) * jnp.where(
        is_target, cos - jnp.float32(margin), cos)
    if has_class_pad:
        # Only the last C tile can contain padded classes, and it always has
        # at least one valid class (c_pad - c < tile_c), so m_new below stays
        # finite and exp(-1e30 - m_new) flushes to exactly 0.
        m_log = jnp.where(class_ids < num_classes, m_log, jnp.float32(-1e30))

    # Online softmax accumulation over the C grid axis.
    m_prev = m_acc[...]
    m_new = jnp.maximum(m_prev, jnp.max(m_log, axis=1, keepdims=True))
    alpha = jnp.exp(m_prev - m_new)
    p = jnp.exp(m_log - m_new)
    l_acc[...] = alpha * l_acc[...] + jnp.sum(p, axis=1, keepdims=True)
    t_acc[...] = t_acc[...] + jnp.sum(
        jnp.where(is_target, m_log, jnp.float32(0.0)), axis=1, keepdims=True)
    m_acc[...] = m_new

    # Last C-tile: emit per-row cross entropy; the mean is one XLA reduce in
    # the wrapper.
    @pl.when(j == pl.num_programs(1) - 1)
    def _finalize():
        loss_ref[...] = m_acc[...] + jnp.log(l_acc[...]) - t_acc[...]


def amsoftmax_forward(embeddings, weights, labels, *, s, margin,
                      tile_n=256, tile_c=None,
                      compute_dtype=jnp.bfloat16,
                      logits_dtype=jnp.float32,
                      weight_resident=None):
    """Returns (loss_scalar, logits) matching PyTorch AMSoftmax.forward."""
    n, e = embeddings.shape
    c, e_w = weights.shape
    assert e == e_w

    vmem_limit = _vmem_limit_bytes()
    big_vmem = vmem_limit >= 80 * 1024 * 1024

    # --- tile_c: big tiles (fewer grid steps / less weight restream), snapped
    # to an exact divisor of C when possible so no class padding is needed.
    if tile_c is None:
        tile_c = 4096 if big_vmem else 2048
    tile_c = min(tile_c, _round_up(c, 128))
    tile_c = _round_up(tile_c, 128)
    if c % 128 == 0 and c % tile_c != 0:
        for cand in range(tile_c - 128, tile_c // 2 - 1, -128):
            if c % cand == 0:
                tile_c = cand
                break
    c_pad = _round_up(c, tile_c)

    # --- tile_n: big enough to amortize per-step overhead and weight
    # restreaming, but keep >= 2 N-tiles when the batch allows it so v7x's
    # second TensorCore gets work via the "parallel" N axis.
    n_pad8 = _round_up(n, 8)
    tile_n = _round_up(min(tile_n, n_pad8), 8)
    if n_pad8 >= 16 and tile_n >= n_pad8:
        tile_n = _round_up((n_pad8 + 1) // 2, 8)
    n_pad = _round_up(n, tile_n)

    cd_b = jnp.dtype(compute_dtype).itemsize
    lg_b = jnp.dtype(logits_dtype).itemsize

    # --- weight residency decision (assume double-buffered constant block).
    pipeline_bytes = (
        2 * tile_n * e * 4                       # emb input (f32), 2 buffers
        + 2 * tile_n * tile_c * lg_b             # logits output, 2 buffers
        + 2 * tile_n * 4                         # labels
        + tile_n * e * cd_b + 3 * tile_n * 4     # VMEM scratch
        + 8 * tile_n * tile_c * 4)               # elementwise temp headroom
    weight_full_bytes = 2 * c_pad * e * cd_b
    if weight_resident is None:
        weight_resident = (pipeline_bytes + weight_full_bytes
                           <= int(0.9 * vmem_limit))

    # --- input prep (pads only when actually needed).
    emb = embeddings.astype(jnp.float32)
    labels2d = labels.astype(jnp.int32).reshape(n, 1)
    if n_pad != n:
        emb = jnp.pad(emb, ((0, n_pad - n), (0, 0)))
        labels2d = jnp.pad(labels2d, ((0, n_pad - n), (0, 0)))
    w = weights.astype(jnp.float32)
    if c_pad != c:
        w = jnp.pad(w, ((0, c_pad - c), (0, 0)))

    # Pre-normalize the class weights once (and cast to the compute dtype).
    w_nrm = _l2_normalize_rows(w, tile_rows=tile_c, out_dtype=compute_dtype,
                               vmem_limit=vmem_limit)

    if weight_resident:
        # Constant index map => fetched once, reused for every grid step.
        w_spec = pl.BlockSpec((c_pad, e), lambda i, j: (0, 0))
    else:
        w_spec = pl.BlockSpec((tile_c, e), lambda i, j: (j, 0))

    kernel = functools.partial(
        _amsoftmax_kernel, s=float(s), margin=float(margin),
        num_classes=c, tile_c=tile_c, has_class_pad=(c_pad != c),
        weight_resident=weight_resident)

    logits_pad, loss_rows = pl.pallas_call(
        kernel,
        out_shape=(
            jax.ShapeDtypeStruct((n_pad, c_pad), logits_dtype),
            jax.ShapeDtypeStruct((n_pad, 1), jnp.float32),
        ),
        grid_spec=pltpu.PrefetchScalarGridSpec(
            num_scalar_prefetch=0,
            grid=(n_pad // tile_n, c_pad // tile_c),
            in_specs=[
                pl.BlockSpec((tile_n, e), lambda i, j: (i, 0)),
                w_spec,
                pl.BlockSpec((tile_n, 1), lambda i, j: (i, 0)),
            ],
            out_specs=(
                pl.BlockSpec((tile_n, tile_c), lambda i, j: (i, j)),
                pl.BlockSpec((tile_n, 1), lambda i, j: (i, 0)),
            ),
            scratch_shapes=[
                pltpu.VMEM((tile_n, e), compute_dtype),   # normalized emb
                pltpu.VMEM((tile_n, 1), jnp.float32),     # running max
                pltpu.VMEM((tile_n, 1), jnp.float32),     # running sum
                pltpu.VMEM((tile_n, 1), jnp.float32),     # target logit
            ],
        ),
        compiler_params=pltpu.CompilerParams(
            dimension_semantics=("parallel", "arbitrary"),
            vmem_limit_bytes=vmem_limit,
        ),
    )(emb, w_nrm, labels2d)

    logits = logits_pad
    if n_pad != n or c_pad != c:
        logits = logits_pad[:n, :c]
    if n_pad != n:
        loss_rows = loss_rows[:n]
    loss = jnp.mean(loss_rows[:, 0])
    return loss, logits


def _reference(embeddings, weights, labels, *, s, margin):
    """Pure-JAX f32 reference matching the PyTorch module exactly."""
    emb_n = embeddings / jnp.maximum(
        jnp.linalg.norm(embeddings, axis=1, keepdims=True), 1e-12)
    w_n = weights / jnp.maximum(
        jnp.linalg.norm(weights, axis=1, keepdims=True), 1e-12)
    logits = emb_n @ w_n.T
    one_hot = jax.nn.one_hot(labels, weights.shape[0], dtype=jnp.float32)
    m_logits = s * (logits - margin * one_hot)
    logp = jax.nn.log_softmax(m_logits, axis=1)
    loss = -jnp.mean(jnp.sum(logp * one_hot, axis=1))
    return loss, logits


if __name__ == "__main__":
    s, margin = 30.0, 0.35

    def run_case(name, n, c, e, **kw):
        key = jax.random.PRNGKey(0)
        k_emb, k_w, k_lab = jax.random.split(key, 3)
        embeddings = jax.random.normal(k_emb, (n, e), jnp.float32)
        # Deterministic kaiming_normal_-style init (fan_in=e, gain=sqrt(2)).
        std = (2.0 / e) ** 0.5
        weights = std * jax.random.normal(k_w, (c, e), jnp.float32)
        labels = jax.random.randint(k_lab, (n,), 0, c, jnp.int32)

        loss, logits = amsoftmax_forward(embeddings, weights, labels,
                                         s=s, margin=margin, **kw)
        jax.block_until_ready((loss, logits))

        ref_loss, ref_logits = _reference(embeddings, weights, labels,
                                          s=s, margin=margin)
        assert logits.shape == (n, c), (name, logits.shape)
        # Tolerances account for bf16 MXU inputs (f32 accumulation); cosine
        # logits live in [-1, 1] so absolute bf16 error is ~1e-2.
        err = float(jnp.max(jnp.abs(logits - ref_logits)))
        assert err < 2e-2, (name, err)
        assert jnp.allclose(loss, ref_loss, atol=1e-1, rtol=3e-2), (
            name, float(loss), float(ref_loss))

    # Small shapes covering: single-tile resident path, multi-tile online
    # softmax with resident in-kernel weight slicing, class/batch padding,
    # and the streaming (non-resident) weight path.
    run_case("single_tile", n=8, c=128, e=128)
    run_case("multi_tile_resident", n=24, c=384, e=128, tile_n=8, tile_c=128)
    run_case("padded", n=10, c=200, e=128)
    run_case("streamed", n=16, c=256, e=128, tile_n=8, tile_c=128,
             weight_resident=False)

    print("KERNEL_OK")
</pallas_src>

<mosaic_0001>
module attributes {stable_mosaic.version = 11 : i64} {
  func.func @_l2norm_kernel(%arg0: i32, %arg1: memref<128x128xf32, #tpu.memory_space<vmem>>, %arg2: memref<128x128xbf16, #tpu.memory_space<vmem>>) attributes {dimension_semantics = [#tpu.dimension_semantics<parallel>], iteration_bounds = array<i64: 1>, scalar_prefetch = 0 : i64, scratch_operands = 0 : i64, tpu.core_type = #tpu.core_type<tc>, window_params = [{transform_indices = @transform_0, window_bounds = array<i64: 128, 128>}, {transform_indices = @transform_1, window_bounds = array<i64: 128, 128>}]} {
    %c0 = arith.constant 0 : index
    %c0_0 = arith.constant 0 : index
    %0 = vector.load %arg1[%c0, %c0_0] : memref<128x128xf32, #tpu.memory_space<vmem>>, vector<128x128xf32>
    %1 = arith.mulf %0, %0 : vector<128x128xf32>
    %cst = arith.constant dense<0.000000e+00> : vector<128xf32>
    %2 = vector.multi_reduction <add>, %1, %cst [1] : vector<128x128xf32> to vector<128xf32>
    %3 = vector.shape_cast %2 : vector<128xf32> to vector<128x1xf32>
    %4 = math.sqrt %3 : vector<128x1xf32>
    %cst_1 = arith.constant 9.99999996E-13 : f32
    %5 = vector.broadcast %cst_1 : f32 to vector<128x1xf32>
    %6 = arith.maximumf %4, %5 : vector<128x1xf32>
    %7 = vector.broadcast %6 : vector<128x1xf32> to vector<128x128xf32>
    %8 = arith.divf %0, %7 : vector<128x128xf32>
    %9 = arith.truncf %8 : vector<128x128xf32> to vector<128x128xbf16>
    %c0_2 = arith.constant 0 : index
    %c0_3 = arith.constant 0 : index
    %10 = vector.load %arg2[%c0_2, %c0_3] : memref<128x128xbf16, #tpu.memory_space<vmem>>, vector<128x128xbf16>
    tpu.vector_store %arg2[%c0_2, %c0_3], %9 {strides = array<i32>} : memref<128x128xbf16, #tpu.memory_space<vmem>>, vector<128x128xbf16>,
    return
  }
  func.func @transform_0(%arg0: i32) -> (i32, i32) {
    %c0_i32 = arith.constant 0 : i32
    %c0_i32_0 = arith.constant 0 : i32
    return %arg0, %c0_i32 : i32, i32
  }
  func.func @transform_1(%arg0: i32) -> (i32, i32) {
    %c0_i32 = arith.constant 0 : i32
    %c0_i32_0 = arith.constant 0 : i32
    return %arg0, %c0_i32 : i32, i32
  }
}

</mosaic_0001>

<llo_original>
// kernel: tpu_custom_call.1
$region0: #{tpu_custom_call.1}
  #allocation0 [shape = 'u32[]', space=smem, size = 0x4, offset = 0x4, fixed_abs, tag = 'smem constant byte address 0x4 - core index']
  #allocation1 [shape = 'u32[144,128]{1,0:T(1,128)}', space=vmem, size = 0x12000, scoped, tag = 'internal scratch']
  %s0 = inlined_call_operand.hbm [shape: f32[128,128], index: 0, kind: input, shape index: {}]
  %s1 = inlined_call_operand.hbm [shape: bf16[128,128], index: 1, kind: output, shape index: {}]
  %s2 = sld [smem:[#allocation0]]
  $region18: #{tpu_custom_call.1} parent=0
    _
  %s4 = ssub.s32 1, %s2
  %s5 = scalar_select 0, %s4, %s2
  $region1: #{tpu_custom_call.1} parent=0
    #allocation2 [shape = 'u8[65536]{0}', space=vmem, size = 0x10000, scoped, tag = 'input window, operand 0, single buffered']
    #allocation3 [shape = 's32[1]{0}', space=sflag, size = 0x4, scoped, tag = 'scoped memory for tpu_custom_call.1']
    #allocation4 [shape = 's32[1]{0}', space=sflag, size = 0x4, scoped, tag = 'scoped memory for tpu_custom_call.1']
    #allocation5 [shape = 'u8[32768]{0}', space=vmem, size = 0x8000, scoped, tag = 'output window, operand 0, single buffered']
    %6 = vsyncpa [#allocation3], 0
    %7 = vsyncpa [#allocation4], 0
    // Predicated region
    $region2: #{tpu_custom_call.1} parent=1 // pred_check
      _
    $region3: #{tpu_custom_call.1} parent=1 // pred_check_branch
      %9 = sbr.rel (0) target = $region5
    $region4: #{tpu_custom_call.1} parent=1 // pred_region
      %s11 = ssub.s32 2048, 2048
      %12 = vsyncadd [#allocation3], %s11
      %s13 = sshll.u32 [#allocation2], 4
      %s14 = int_to_ptr.vmem [resolvable:$true] %s13
      %19 = dma.hbm_to_vmem [thread:$0]  %s0, 2048, %s14, [#allocation3], 128, 128, 8
    $region5: #{tpu_custom_call.1} parent=1 // pred_fallthru
      _
    // Predicated region
    $region6: #{tpu_custom_call.1} parent=1 // pred_check
      _
    $region7: #{tpu_custom_call.1} parent=1 // pred_check_branch
      %21 = sbr.rel (0) target = $region9
    $region8: #{tpu_custom_call.1} parent=1 // pred_region
      %22 = dma.done [#allocation3], 2048
    $region9: #{tpu_custom_call.1} parent=1 // pred_fallthru
      _
    %v23 = vld [vmem:[#allocation2] sm:$0xff]
    %v24 = vld [vmem:[#allocation2 + $0x8] sm:$0xff]
    %v25 = vld [vmem:[#allocation2 + $0x10] sm:$0xff]
    %v26 = vld [vmem:[#allocation2 + $0x18] sm:$0xff]
    %v27 = vld [vmem:[#allocation2 + $0x20] sm:$0xff]
    %v28 = vld [vmem:[#allocation2 + $0x28] sm:$0xff]
    %v29 = vld [vmem:[#allocation2 + $0x30] sm:$0xff]
    %v30 = vld [vmem:[#allocation2 + $0x38] sm:$0xff]
    %v31 = vld [vmem:[#allocation2 + $0x40] sm:$0xff]
    %v32 = vld [vmem:[#allocation2 + $0x48] sm:$0xff]
    %v33 = vld [vmem:[#allocation2 + $0x50] sm:$0xff]
    %v34 = vld [vmem:[#allocation2 + $0x58] sm:$0xff]
    %v35 = vld [vmem:[#allocation2 + $0x60] sm:$0xff]
    %v36 = vld [vmem:[#allocation2 + $0x68] sm:$0xff]
    %v37 = vld [vmem:[#allocation2 + $0x70] sm:$0xff]
    %v38 = vld [vmem:[#allocation2 + $0x78] sm:$0xff]
    %v39 = vmul.f32 %v23, %v23
    %v40 = vmul.f32 %v24, %v24
    %v41 = vmul.f32 %v25, %v25
    %v42 = vmul.f32 %v26, %v26
    %v43 = vmul.f32 %v27, %v27
    %v44 = vmul.f32 %v28, %v28
    %v45 = vmul.f32 %v29, %v29
    %v46 = vmul.f32 %v30, %v30
    %v47 = vmul.f32 %v31, %v31
    %v48 = vmul.f32 %v32, %v32
    %v49 = vmul.f32 %v33, %v33
    %v50 = vmul.f32 %v34, %v34
    %v51 = vmul.f32 %v35, %v35
    %v52 = vmul.f32 %v36, %v36
    %v53 = vmul.f32 %v37, %v37
    %v54 = vmul.f32 %v38, %v38
    %55 = vadd.xlane.f32.xlu0 %v39
    %v56 = vpop.xlane.xlu0 %55
    %57 = vadd.xlane.f32.xlu0 %v40
    %v58 = vpop.xlane.xlu0 %57
    %59 = vadd.xlane.f32.xlu0 %v41
    %v60 = vpop.xlane.xlu0 %59
    %61 = vadd.xlane.f32.xlu0 %v42
    %v62 = vpop.xlane.xlu0 %61
    %63 = vadd.xlane.f32.xlu0 %v43
    %v64 = vpop.xlane.xlu0 %63
    %65 = vadd.xlane.f32.xlu0 %v44
    %v66 = vpop.xlane.xlu0 %65
    %67 = vadd.xlane.f32.xlu0 %v45
    %v68 = vpop.xlane.xlu0 %67
    %69 = vadd.xlane.f32.xlu0 %v46
    %v70 = vpop.xlane.xlu0 %69
    %71 = vadd.xlane.f32.xlu0 %v47
    %v72 = vpop.xlane.xlu0 %71
    %73 = vadd.xlane.f32.xlu0 %v48
    %v74 = vpop.xlane.xlu0 %73
    %75 = vadd.xlane.f32.xlu0 %v49
    %v76 = vpop.xlane.xlu0 %75
    %77 = vadd.xlane.f32.xlu0 %v50
    %v78 = vpop.xlane.xlu0 %77
    %79 = vadd.xlane.f32.xlu0 %v51
    %v80 = vpop.xlane.xlu0 %79
    %81 = vadd.xlane.f32.xlu0 %v52
    %v82 = vpop.xlane.xlu0 %81
    %83 = vadd.xlane.f32.xlu0 %v53
    %v84 = vpop.xlane.xlu0 %83
    %85 = vadd.xlane.f32.xlu0 %v54
    %v86 = vpop.xlane.xlu0 %85
    %v87 = vrsqrt.pop %v56
    %v88 = vmul.f32 %v56, %v87
    %vm89 = vcmp.eq.f32.partialorder %v56, inf
    %v90 = vsel %vm89, %v56, %v88
    %vm91 = vcmp.eq.f32.partialorder %v56, 0.0
    %v92 = vand.u32 %v56, 2147483648
    %v93 = vsel %vm91, %v92, %v90
    %v94 = vrsqrt.pop %v58
    %v95 = vmul.f32 %v58, %v94
    %vm96 = vcmp.eq.f32.partialorder %v58, inf
    %v97 = vsel %vm96, %v58, %v95
    %vm98 = vcmp.eq.f32.partialorder %v58, 0.0
    %v99 = vand.u32 %v58, 2147483648
    %v100 = vsel %vm98, %v99, %v97
    %v101 = vrsqrt.pop %v60
    %v102 = vmul.f32 %v60, %v101
    %vm103 = vcmp.eq.f32.partialorder %v60, inf
    %v104 = vsel %vm103, %v60, %v102
    %vm105 = vcmp.eq.f32.partialorder %v60, 0.0
    %v106 = vand.u32 %v60, 2147483648
    %v107 = vsel %vm105, %v106, %v104
    %v108 = vrsqrt.pop %v62
    %v109 = vmul.f32 %v62, %v108
    %vm110 = vcmp.eq.f32.partialorder %v62, inf
    %v111 = vsel %vm110, %v62, %v109
    %vm112 = vcmp.eq.f32.partialorder %v62, 0.0
    %v113 = vand.u32 %v62, 2147483648
    %v114 = vsel %vm112, %v113, %v111
    %v115 = vrsqrt.pop %v64
    %v116 = vmul.f32 %v64, %v115
    %vm117 = vcmp.eq.f32.partialorder %v64, inf
    %v118 = vsel %vm117, %v64, %v116
    %vm119 = vcmp.eq.f32.partialorder %v64, 0.0
    %v120 = vand.u32 %v64, 2147483648
    %v121 = vsel %vm119, %v120, %v118
    %v122 = vrsqrt.pop %v66
    %v123 = vmul.f32 %v66, %v122
    %vm124 = vcmp.eq.f32.partialorder %v66, inf
    %v125 = vsel %vm124, %v66, %v123
    %vm126 = vcmp.eq.f32.partialorder %v66, 0.0
    %v127 = vand.u32 %v66, 2147483648
    %v128 = vsel %vm126, %v127, %v125
    %v129 = vrsqrt.pop %v68
    %v130 = vmul.f32 %v68, %v129
    %vm131 = vcmp.eq.f32.partialorder %v68, inf
    %v132 = vsel %vm131, %v68, %v130
    %vm133 = vcmp.eq.f32.partialorder %v68, 0.0
    %v134 = vand.u32 %v68, 2147483648
    %v135 = vsel %vm133, %v134, %v132
    %v136 = vrsqrt.pop %v70
    %v137 = vmul.f32 %v70, %v136
    %vm138 = vcmp.eq.f32.partialorder %v70, inf
    %v139 = vsel %vm138, %v70, %v137
    %vm140 = vcmp.eq.f32.partialorder %v70, 0.0
    %v141 = vand.u32 %v70, 2147483648
    %v142 = vsel %vm140, %v141, %v139
    %v143 = vrsqrt.pop %v72
    %v144 = vmul.f32 %v72, %v143
    %vm145 = vcmp.eq.f32.partialorder %v72, inf
    %v146 = vsel %vm145, %v72, %v144
    %vm147 = vcmp.eq.f32.partialorder %v72, 0.0
    %v148 = vand.u32 %v72, 2147483648
    %v149 = vsel %vm147, %v148, %v146
    %v150 = vrsqrt.pop %v74
    %v151 = vmul.f32 %v74, %v150
    %vm152 = vcmp.eq.f32.partialorder %v74, inf
    %v153 = vsel %vm152, %v74, %v151
    %vm154 = vcmp.eq.f32.partialorder %v74, 0.0
    %v155 = vand.u32 %v74, 2147483648
    %v156 = vsel %vm154, %v155, %v153
    %v157 = vrsqrt.pop %v76
    %v158 = vmul.f32 %v76, %v157
    %vm159 = vcmp.eq.f32.partialorder %v76, inf
    %v160 = vsel %vm159, %v76, %v158
    %vm161 = vcmp.eq.f32.partialorder %v76, 0.0
    %v162 = vand.u32 %v76, 2147483648
    %v163 = vsel %vm161, %v162, %v160
    %v164 = vrsqrt.pop %v78
    %v165 = vmul.f32 %v78, %v164
    %vm166 = vcmp.eq.f32.partialorder %v78, inf
    %v167 = vsel %vm166, %v78, %v165
    %vm168 = vcmp.eq.f32.partialorder %v78, 0.0
    %v169 = vand.u32 %v78, 2147483648
    %v170 = vsel %vm168, %v169, %v167
    %v171 = vrsqrt.pop %v80
    %v172 = vmul.f32 %v80, %v171
    %vm173 = vcmp.eq.f32.partialorder %v80, inf
    %v174 = vsel %vm173, %v80, %v172
    %vm175 = vcmp.eq.f32.partialorder %v80, 0.0
    %v176 = vand.u32 %v80, 2147483648
    %v177 = vsel %vm175, %v176, %v174
    %v178 = vrsqrt.pop %v82
    %v179 = vmul.f32 %v82, %v178
    %vm180 = vcmp.eq.f32.partialorder %v82, inf
    %v181 = vsel %vm180, %v82, %v179
    %vm182 = vcmp.eq.f32.partialorder %v82, 0.0
    %v183 = vand.u32 %v82, 2147483648
    %v184 = vsel %vm182, %v183, %v181
    %v185 = vrsqrt.pop %v84
    %v186 = vmul.f32 %v84, %v185
    %vm187 = vcmp.eq.f32.partialorder %v84, inf
    %v188 = vsel %vm187, %v84, %v186
    %vm189 = vcmp.eq.f32.partialorder %v84, 0.0
    %v190 = vand.u32 %v84, 2147483648
    %v191 = vsel %vm189, %v190, %v188
    %v192 = vrsqrt.pop %v86
    %v193 = vmul.f32 %v86, %v192
    %vm194 = vcmp.eq.f32.partialorder %v86, inf
    %v195 = vsel %vm194, %v86, %v193
    %vm196 = vcmp.eq.f32.partialorder %v86, 0.0
    %v197 = vand.u32 %v86, 2147483648
    %v198 = vsel %vm196, %v197, %v195
    %v199 = vmax.f32 %v93, 1e-12
    %v200 = vmax.f32 %v100, 1e-12
    %v201 = vmax.f32 %v107, 1e-12
    %v202 = vmax.f32 %v114, 1e-12
    %v203 = vmax.f32 %v121, 1e-12
    %v204 = vmax.f32 %v128, 1e-12
    %v205 = vmax.f32 %v135, 1e-12
    %v206 = vmax.f32 %v142, 1e-12
    %v207 = vmax.f32 %v149, 1e-12
    %v208 = vmax.f32 %v156, 1e-12
    %v209 = vmax.f32 %v163, 1e-12
    %v210 = vmax.f32 %v170, 1e-12
    %v211 = vmax.f32 %v177, 1e-12
    %v212 = vmax.f32 %v184, 1e-12
    %v213 = vmax.f32 %v191, 1e-12
    %v214 = vmax.f32 %v198, 1e-12
    %v215 = vrcp.pop %v199
    %v216 = vmul.f32 %v23, %v215
    %v217 = vrcp.pop %v200
    %v218 = vmul.f32 %v24, %v217
    %v219 = vrcp.pop %v201
    %v220 = vmul.f32 %v25, %v219
    %v221 = vrcp.pop %v202
    %v222 = vmul.f32 %v26, %v221
    %v223 = vrcp.pop %v203
    %v224 = vmul.f32 %v27, %v223
    %v225 = vrcp.pop %v204
    %v226 = vmul.f32 %v28, %v225
    %v227 = vrcp.pop %v205
    %v228 = vmul.f32 %v29, %v227
    %v229 = vrcp.pop %v206
    %v230 = vmul.f32 %v30, %v229
    %v231 = vrcp.pop %v207
    %v232 = vmul.f32 %v31, %v231
    %v233 = vrcp.pop %v208
    %v234 = vmul.f32 %v32, %v233
    %v235 = vrcp.pop %v209
    %v236 = vmul.f32 %v33, %v235
    %v237 = vrcp.pop %v210
    %v238 = vmul.f32 %v34, %v237
    %v239 = vrcp.pop %v211
    %v240 = vmul.f32 %v35, %v239
    %v241 = vrcp.pop %v212
    %v242 = vmul.f32 %v36, %v241
    %v243 = vrcp.pop %v213
    %v244 = vmul.f32 %v37, %v243
    %v245 = vrcp.pop %v214
    %v246 = vmul.f32 %v38, %v245
    %v247 = vpack.c.bf16 %v218, %v216
    %v248 = vpack.c.bf16 %v222, %v220
    %v249 = vpack.c.bf16 %v226, %v224
    %v250 = vpack.c.bf16 %v230, %v228
    %v251 = vpack.c.bf16 %v234, %v232
    %v252 = vpack.c.bf16 %v238, %v236
    %v253 = vpack.c.bf16 %v242, %v240
    %v254 = vpack.c.bf16 %v246, %v244
    %v263 = vunpack.c.l.b16 %v247
    %v264 = vunpack.c.h.b16 %v247
    %v265 = vunpack.c.l.b16 %v248
    %v266 = vunpack.c.h.b16 %v248
    %v267 = vunpack.c.l.b16 %v249
    %v268 = vunpack.c.h.b16 %v249
    %v269 = vunpack.c.l.b16 %v250
    %v270 = vunpack.c.h.b16 %v250
    %v271 = vunpack.c.l.b16 %v251
    %v272 = vunpack.c.h.b16 %v251
    %v273 = vunpack.c.l.b16 %v252
    %v274 = vunpack.c.h.b16 %v252
    %v275 = vunpack.c.l.b16 %v253
    %v276 = vunpack.c.h.b16 %v253
    %v277 = vunpack.c.l.b16 %v254
    %v278 = vunpack.c.h.b16 %v254
    %v279 = vpack.c.b16 %v263, %v263
    %v280 = vpack.c.b16 %v264, %v264
    %v281 = vpack.c.b16 %v265, %v265
    %v282 = vpack.c.b16 %v266, %v266
    %v283 = vpack.c.b16 %v267, %v267
    %v284 = vpack.c.b16 %v268, %v268
    %v285 = vpack.c.b16 %v269, %v269
    %v286 = vpack.c.b16 %v270, %v270
    %v287 = vpack.c.b16 %v271, %v271
    %v288 = vpack.c.b16 %v272, %v272
    %v289 = vpack.c.b16 %v273, %v273
    %v290 = vpack.c.b16 %v274, %v274
    %v291 = vpack.c.b16 %v275, %v275
    %v292 = vpack.c.b16 %v276, %v276
    %v293 = vpack.c.b16 %v277, %v277
    %v294 = vpack.c.b16 %v278, %v278
    %311 = vst [vmem:[#allocation5] sm:$0xf] %v279
    %312 = vst [vmem:[#allocation5 + $0x4] sm:$0xf] %v280
    %313 = vst [vmem:[#allocation5 + $0x8] sm:$0xf] %v281
    %314 = vst [vmem:[#allocation5 + $0xc] sm:$0xf] %v282
    %315 = vst [vmem:[#allocation5 + $0x10] sm:$0xf] %v283
    %316 = vst [vmem:[#allocation5 + $0x14] sm:$0xf] %v284
    %317 = vst [vmem:[#allocation5 + $0x18] sm:$0xf] %v285
    %318 = vst [vmem:[#allocation5 + $0x1c] sm:$0xf] %v286
    %319 = vst [vmem:[#allocation5 + $0x20] sm:$0xf] %v287
    %320 = vst [vmem:[#allocation5 + $0x24] sm:$0xf] %v288
    %321 = vst [vmem:[#allocation5 + $0x28] sm:$0xf] %v289
    %322 = vst [vmem:[#allocation5 + $0x2c] sm:$0xf] %v290
    %323 = vst [vmem:[#allocation5 + $0x30] sm:$0xf] %v291
    %324 = vst [vmem:[#allocation5 + $0x34] sm:$0xf] %v292
    %325 = vst [vmem:[#allocation5 + $0x38] sm:$0xf] %v293
    %326 = vst [vmem:[#allocation5 + $0x3c] sm:$0xf] %v294
    // Predicated region
    $region10: #{tpu_custom_call.1} parent=1 // pred_check
      _
    $region11: #{tpu_custom_call.1} parent=1 // pred_check_branch
      %328 = sbr.rel (0) target = $region13
    $region12: #{tpu_custom_call.1} parent=1 // pred_region
      %s330 = ssub.s32 1024, 1024
      %331 = vsyncadd [#allocation4], %s330
      %s332 = sshll.u32 [#allocation5], 4
      %s333 = int_to_ptr.vmem [resolvable:$true] %s332
      %338 = dma.vmem_to_hbm [thread:$0]  %s333, 1024, %s1, [#allocation4], 64, 64, 4
    $region13: #{tpu_custom_call.1} parent=1 // pred_fallthru
      _
    // Predicated region
    $region14: #{tpu_custom_call.1} parent=1 // pred_check
      _
    $region15: #{tpu_custom_call.1} parent=1 // pred_check_branch
      %340 = sbr.rel (0) target = $region17
    $region16: #{tpu_custom_call.1} parent=1 // pred_region
      %341 = dma.done [#allocation4], 1024
    $region17: #{tpu_custom_call.1} parent=1 // pred_fallthru
      _
    %342 = vsyncpa [#allocation3], 1
    %343 = vsyncpa [#allocation4], 1

</llo_original>
